<compile_context>
chip_gen: v6e
topology: v6e:2x2x1
jax: 0.10.0
libtpu: 0.0.40
codegen_flags: <defaults>
</compile_context>

<pallas_src>
import jax
import jax.numpy as jnp
from jax import lax
from jax.experimental import pallas as pl
from jax.experimental.pallas import tpu as pltpu


def _round_up(x, m):
    return ((x + m - 1) // m) * m


def _mlp_kernel(z_ref,
                w1t_ref, b1_ref,
                w2t_ref, b2_ref,
                w3t_ref, b3_ref,
                w4d_ref, b4d_ref,
                p0_ref):
    # z_ref: (TILE_B, 8) batch-major, streamed straight from HBM (no wrapper transpose).
    x = z_ref[...].astype(jnp.float32)

    # Layer 1: contract the feature axis directly (== W1^T @ x^T), same pattern as the
    # 'bqd,bkd->bqk' einsum in flash attention, so intermediates are feature-major and
    # lane-dense: (32, TILE_B).
    h = lax.dot_general(w1t_ref[...], x, (((1,), (1,)), ((), ())),
                        preferred_element_type=jnp.float32)
    h = jnp.maximum(h + b1_ref[...], 0.0)

    # Layer 2: (16,32) @ (32,TILE_B) -> (16,TILE_B)
    h = jnp.dot(w2t_ref[...], h, preferred_element_type=jnp.float32)
    h = jnp.maximum(h + b2_ref[...], 0.0)

    # Layer 3: (8,16) @ (16,TILE_B) -> (8,TILE_B)
    h = jnp.dot(w3t_ref[...], h, preferred_element_type=jnp.float32)
    h = jnp.maximum(h + b3_ref[...], 0.0)

    # Layer 4 + 2-class softmax == sigmoid of the logit difference:
    #   softmax([l0,l1])[0] = 1 / (1 + exp(l1 - l0)) = sigmoid(l0 - l1)
    # The M=1 matmul is replaced by a VPU multiply + sublane (XLU) reduction.
    d = jnp.sum(w4d_ref[...] * h, axis=0, keepdims=True) + b4d_ref[...]   # (1, TILE_B)

    # Exact sigmoid (no approx reciprocal) -> matches the softmax reference tightly.
    p0_ref[...] = 1.0 / (1.0 + jnp.exp(-d))


def pavement_condition_forward(z, params, tile_b=None):
    """z: (B, 8) float32 or bfloat16. params: dict of (in,out) weights, (1,out) biases.

    Returns (B, 2) float32 softmax probabilities (matches the PyTorch module).
    """
    B = z.shape[0]
    if tile_b is None:
        # Large tiles amortize per-grid-step overhead; cdiv(B,2) ensures >=2 grid steps
        # on large batches (megacore split on v7x); 8192 cap bounds the lane-padded
        # (tile_b, 8) VMEM staging block on v7x's 64 MiB VMEM.
        tile_b = min(8192, max(128, _round_up(pl.cdiv(B, 2), 128)))
    b_pad = _round_up(B, tile_b)
    grid = (b_pad // tile_b,)

    # Only pad along batch when needed (cheap contiguous copy; no transpose pass).
    z_in = z if b_pad == B else jnp.pad(z, ((0, b_pad - B), (0, 0)))

    # Transposed weights (out,in) so each layer is W^T @ h; biases as columns.
    w1t = params["w1"].T.astype(jnp.float32)                 # (32, 8)
    b1c = params["b1"].reshape(-1, 1).astype(jnp.float32)    # (32, 1)
    w2t = params["w2"].T.astype(jnp.float32)                 # (16, 32)
    b2c = params["b2"].reshape(-1, 1).astype(jnp.float32)    # (16, 1)
    w3t = params["w3"].T.astype(jnp.float32)                 # (8, 16)
    b3c = params["b3"].reshape(-1, 1).astype(jnp.float32)    # (8, 1)
    # Fold the 2-class head into a single logit-difference column.
    w4d = (params["w4"][:, 0] - params["w4"][:, 1]).reshape(-1, 1).astype(jnp.float32)  # (8, 1)
    b4d = (params["b4"][:, 0] - params["b4"][:, 1]).reshape(1, 1).astype(jnp.float32)   # (1, 1)

    p0_row = pl.pallas_call(
        _mlp_kernel,
        out_shape=jax.ShapeDtypeStruct((1, b_pad), jnp.float32),
        grid=grid,
        in_specs=[
            pl.BlockSpec((tile_b, 8), lambda i: (i, 0)),     # z (streamed, batch-major)
            pl.BlockSpec((32, 8), lambda i: (0, 0)),         # w1^T (VMEM-resident)
            pl.BlockSpec((32, 1), lambda i: (0, 0)),         # b1
            pl.BlockSpec((16, 32), lambda i: (0, 0)),        # w2^T
            pl.BlockSpec((16, 1), lambda i: (0, 0)),         # b2
            pl.BlockSpec((8, 16), lambda i: (0, 0)),         # w3^T
            pl.BlockSpec((8, 1), lambda i: (0, 0)),          # b3
            pl.BlockSpec((8, 1), lambda i: (0, 0)),          # w4 diff column
            pl.BlockSpec((1, 1), lambda i: (0, 0)),          # b4 diff
        ],
        out_specs=pl.BlockSpec((1, tile_b), lambda i: (0, i)),  # lane-dense p0 row
        compiler_params=pltpu.CompilerParams(
            dimension_semantics=("parallel",)),
    )(z_in, w1t, b1c, w2t, b2c, w3t, b3c, w4d, b4d)

    # Tiny batch-major assembly in the wrapper (p1 = 1 - p0); fuses in XLA.
    p0 = p0_row[0, :B]
    return jnp.stack([p0, 1.0 - p0], axis=-1)


def init_params(key):
    """Deterministic init mimicking nn.Linear shapes.

    PyTorch nn.Linear(in,out) holds weight (out,in); we store the transpose
    (in,out) so references do z @ W. Biases kept as (1,out)."""
    dims = [(8, 32), (32, 16), (16, 8), (8, 2)]
    params = {}
    for i, (d_in, d_out) in enumerate(dims, start=1):
        key, kw, kb = jax.random.split(key, 3)
        bound = 1.0 / jnp.sqrt(d_in)
        params[f"w{i}"] = jax.random.uniform(
            kw, (d_in, d_out), jnp.float32, -bound, bound)
        params[f"b{i}"] = jax.random.uniform(
            kb, (1, d_out), jnp.float32, -bound, bound)
    return params


def reference_forward(z, params):
    h = jax.nn.relu(z @ params["w1"] + params["b1"])
    h = jax.nn.relu(h @ params["w2"] + params["b2"])
    h = jax.nn.relu(h @ params["w3"] + params["b3"])
    logits = h @ params["w4"] + params["b4"]
    return jax.nn.softmax(logits, axis=1)


if __name__ == "__main__":
    key = jax.random.PRNGKey(0)
    key, kz = jax.random.split(key)
    params = init_params(key)

    # Small-batch check (single grid step, padded to 128 sublanes).
    batch = 8
    z = jax.random.normal(kz, (batch, 8), dtype=jnp.float32)
    out = jax.block_until_ready(pavement_condition_forward(z, params))
    ref = reference_forward(z, params)
    assert out.shape == (batch, 2)
    assert jnp.allclose(out, ref, atol=1e-5, rtol=1e-5), "mismatch vs reference"
    assert jnp.allclose(jnp.sum(out, axis=1), 1.0, atol=1e-6)

    # Non-multiple-of-tile batch exercising the multi-step parallel grid + padding.
    key, kz2 = jax.random.split(key)
    batch2 = 300
    z2 = jax.random.normal(kz2, (batch2, 8), dtype=jnp.float32)
    out2 = jax.block_until_ready(
        pavement_condition_forward(z2, params, tile_b=128))
    ref2 = reference_forward(z2, params)
    assert out2.shape == (batch2, 2)
    assert jnp.allclose(out2, ref2, atol=1e-5, rtol=1e-5), "mismatch vs reference (tiled)"

    # bfloat16 input stream (halves the dominant HBM read); kernel casts to f32, so it
    # matches a reference evaluated on the same bf16-rounded inputs.
    z2_bf16 = z2.astype(jnp.bfloat16)
    out3 = jax.block_until_ready(pavement_condition_forward(z2_bf16, params))
    ref3 = reference_forward(z2_bf16.astype(jnp.float32), params)
    assert jnp.allclose(out3, ref3, atol=1e-5, rtol=1e-5), "mismatch vs reference (bf16)"

    print("KERNEL_OK")
</pallas_src>

<mosaic_0001>
module attributes {stable_mosaic.version = 11 : i64} {
  func.func @_mlp_kernel(%arg0: i32, %arg1: memref<128x8xf32, #tpu.memory_space<vmem>>, %arg2: memref<32x8xf32, #tpu.memory_space<vmem>>, %arg3: memref<32x1xf32, #tpu.memory_space<vmem>>, %arg4: memref<16x32xf32, #tpu.memory_space<vmem>>, %arg5: memref<16x1xf32, #tpu.memory_space<vmem>>, %arg6: memref<8x16xf32, #tpu.memory_space<vmem>>, %arg7: memref<8x1xf32, #tpu.memory_space<vmem>>, %arg8: memref<8x1xf32, #tpu.memory_space<vmem>>, %arg9: memref<1x1xf32, #tpu.memory_space<vmem>>, %arg10: memref<1x128xf32, #tpu.memory_space<vmem>>) attributes {dimension_semantics = [#tpu.dimension_semantics<parallel>], iteration_bounds = array<i64: 1>, scalar_prefetch = 0 : i64, scratch_operands = 0 : i64, tpu.core_type = #tpu.core_type<tc>, window_params = [{transform_indices = @transform_0, window_bounds = array<i64: 128, 8>}, {pipeline_mode = #tpu.pipeline_mode<synchronous>, transform_indices = @transform_1, window_bounds = array<i64: 32, 8>}, {pipeline_mode = #tpu.pipeline_mode<synchronous>, transform_indices = @transform_2, window_bounds = array<i64: 32, 1>}, {pipeline_mode = #tpu.pipeline_mode<synchronous>, transform_indices = @transform_3, window_bounds = array<i64: 16, 32>}, {pipeline_mode = #tpu.pipeline_mode<synchronous>, transform_indices = @transform_4, window_bounds = array<i64: 16, 1>}, {pipeline_mode = #tpu.pipeline_mode<synchronous>, transform_indices = @transform_5, window_bounds = array<i64: 8, 16>}, {pipeline_mode = #tpu.pipeline_mode<synchronous>, transform_indices = @transform_6, window_bounds = array<i64: 8, 1>}, {pipeline_mode = #tpu.pipeline_mode<synchronous>, transform_indices = @transform_7, window_bounds = array<i64: 8, 1>}, {pipeline_mode = #tpu.pipeline_mode<synchronous>, transform_indices = @transform_8, window_bounds = array<i64: 1, 1>}, {transform_indices = @transform_9, window_bounds = array<i64: 1, 128>}]} {
    %c0 = arith.constant 0 : index
    %c0_0 = arith.constant 0 : index
    %0 = vector.load %arg1[%c0, %c0_0] : memref<128x8xf32, #tpu.memory_space<vmem>>, vector<128x8xf32>
    %c0_1 = arith.constant 0 : index
    %c0_2 = arith.constant 0 : index
    %1 = vector.load %arg2[%c0_1, %c0_2] : memref<32x8xf32, #tpu.memory_space<vmem>>, vector<32x8xf32>
    %cst = arith.constant dense<0.000000e+00> : vector<32x128xf32>
    %2 = tpu.matmul %1, %0, %cst {dimension_numbers = #tpu.dot_dimension_numbers<[1], [1], [0], [0], [0, 0, 1, 0], [], []>} : vector<32x8xf32>, vector<128x8xf32>, vector<32x128xf32> -> vector<32x128xf32>
    %c0_3 = arith.constant 0 : index
    %c0_4 = arith.constant 0 : index
    %3 = vector.load %arg3[%c0_3, %c0_4] : memref<32x1xf32, #tpu.memory_space<vmem>>, vector<32x1xf32>
    %4 = vector.broadcast %3 : vector<32x1xf32> to vector<32x128xf32>
    %5 = arith.addf %2, %4 : vector<32x128xf32>
    %cst_5 = arith.constant 0.000000e+00 : f32
    %6 = vector.broadcast %cst_5 : f32 to vector<32x128xf32>
    %7 = arith.maximumf %5, %6 : vector<32x128xf32>
    %c0_6 = arith.constant 0 : index
    %c0_7 = arith.constant 0 : index
    %8 = vector.load %arg4[%c0_6, %c0_7] : memref<16x32xf32, #tpu.memory_space<vmem>>, vector<16x32xf32>
    %cst_8 = arith.constant dense<0.000000e+00> : vector<16x128xf32>
    %9 = tpu.matmul %8, %7, %cst_8 {dimension_numbers = #tpu.dot_dimension_numbers<[1], [0], [0], [1], [0, 0, 1, 1], [], []>} : vector<16x32xf32>, vector<32x128xf32>, vector<16x128xf32> -> vector<16x128xf32>
    %c0_9 = arith.constant 0 : index
    %c0_10 = arith.constant 0 : index
    %10 = vector.load %arg5[%c0_9, %c0_10] : memref<16x1xf32, #tpu.memory_space<vmem>>, vector<16x1xf32>
    %11 = vector.broadcast %10 : vector<16x1xf32> to vector<16x128xf32>
    %12 = arith.addf %9, %11 : vector<16x128xf32>
    %cst_11 = arith.constant 0.000000e+00 : f32
    %13 = vector.broadcast %cst_11 : f32 to vector<16x128xf32>
    %14 = arith.maximumf %12, %13 : vector<16x128xf32>
    %c0_12 = arith.constant 0 : index
    %c0_13 = arith.constant 0 : index
    %15 = vector.load %arg6[%c0_12, %c0_13] : memref<8x16xf32, #tpu.memory_space<vmem>>, vector<8x16xf32>
    %cst_14 = arith.constant dense<0.000000e+00> : vector<8x128xf32>
    %16 = tpu.matmul %15, %14, %cst_14 {dimension_numbers = #tpu.dot_dimension_numbers<[1], [0], [0], [1], [0, 0, 1, 1], [], []>} : vector<8x16xf32>, vector<16x128xf32>, vector<8x128xf32> -> vector<8x128xf32>
    %c0_15 = arith.constant 0 : index
    %c0_16 = arith.constant 0 : index
    %17 = vector.load %arg7[%c0_15, %c0_16] : memref<8x1xf32, #tpu.memory_space<vmem>>, vector<8x1xf32>
    %18 = vector.broadcast %17 : vector<8x1xf32> to vector<8x128xf32>
    %19 = arith.addf %16, %18 : vector<8x128xf32>
    %cst_17 = arith.constant 0.000000e+00 : f32
    %20 = vector.broadcast %cst_17 : f32 to vector<8x128xf32>
    %21 = arith.maximumf %19, %20 : vector<8x128xf32>
    %c0_18 = arith.constant 0 : index
    %c0_19 = arith.constant 0 : index
    %22 = vector.load %arg8[%c0_18, %c0_19] : memref<8x1xf32, #tpu.memory_space<vmem>>, vector<8x1xf32>
    %23 = vector.broadcast %22 : vector<8x1xf32> to vector<8x128xf32>
    %24 = arith.mulf %23, %21 : vector<8x128xf32>
    %cst_20 = arith.constant dense<0.000000e+00> : vector<128xf32>
    %25 = vector.multi_reduction <add>, %24, %cst_20 [0] : vector<8x128xf32> to vector<128xf32>
    %26 = vector.shape_cast %25 : vector<128xf32> to vector<1x128xf32>
    %c0_21 = arith.constant 0 : index
    %c0_22 = arith.constant 0 : index
    %27 = vector.load %arg9[%c0_21, %c0_22] : memref<1x1xf32, #tpu.memory_space<vmem>>, vector<1x1xf32>
    %28 = vector.broadcast %27 : vector<1x1xf32> to vector<1x128xf32>
    %29 = arith.addf %26, %28 : vector<1x128xf32>
    %cst_23 = arith.constant 0.000000e+00 : f32
    %30 = vector.broadcast %cst_23 : f32 to vector<1x128xf32>
    %31 = arith.subf %30, %29 : vector<1x128xf32>
    %32 = math.exp %31 : vector<1x128xf32>
    %cst_24 = arith.constant 1.000000e+00 : f32
    %33 = vector.broadcast %cst_24 : f32 to vector<1x128xf32>
    %34 = arith.addf %33, %32 : vector<1x128xf32>
    %cst_25 = arith.constant 1.000000e+00 : f32
    %35 = vector.broadcast %cst_25 : f32 to vector<1x128xf32>
    %36 = arith.divf %35, %34 : vector<1x128xf32>
    %c0_26 = arith.constant 0 : index
    %c0_27 = arith.constant 0 : index
    %37 = vector.load %arg10[%c0_26, %c0_27] : memref<1x128xf32, #tpu.memory_space<vmem>>, vector<1x128xf32>
    tpu.vector_store %arg10[%c0_26, %c0_27], %36 {strides = array<i32>} : memref<1x128xf32, #tpu.memory_space<vmem>>, vector<1x128xf32>,
    return
  }
  func.func @transform_0(%arg0: i32) -> (i32, i32) {
    %c0_i32 = arith.constant 0 : i32
    %c0_i32_0 = arith.constant 0 : i32
    return %arg0, %c0_i32 : i32, i32
  }
  func.func @transform_1(%arg0: i32) -> (i32, i32) {
    %c0_i32 = arith.constant 0 : i32
    %c0_i32_0 = arith.constant 0 : i32
    %c0_i32_1 = arith.constant 0 : i32
    return %c0_i32, %c0_i32_0 : i32, i32
  }
  func.func @transform_2(%arg0: i32) -> (i32, i32) {
    %c0_i32 = arith.constant 0 : i32
    %c0_i32_0 = arith.constant 0 : i32
    %c0_i32_1 = arith.constant 0 : i32
    return %c0_i32, %c0_i32_0 : i32, i32
  }
  func.func @transform_3(%arg0: i32) -> (i32, i32) {
    %c0_i32 = arith.constant 0 : i32
    %c0_i32_0 = arith.constant 0 : i32
    %c0_i32_1 = arith.constant 0 : i32
    return %c0_i32, %c0_i32_0 : i32, i32
  }
  func.func @transform_4(%arg0: i32) -> (i32, i32) {
    %c0_i32 = arith.constant 0 : i32
    %c0_i32_0 = arith.constant 0 : i32
    %c0_i32_1 = arith.constant 0 : i32
    return %c0_i32, %c0_i32_0 : i32, i32
  }
  func.func @transform_5(%arg0: i32) -> (i32, i32) {
    %c0_i32 = arith.constant 0 : i32
    %c0_i32_0 = arith.constant 0 : i32
    %c0_i32_1 = arith.constant 0 : i32
    return %c0_i32, %c0_i32_0 : i32, i32
  }
  func.func @transform_6(%arg0: i32) -> (i32, i32) {
    %c0_i32 = arith.constant 0 : i32
    %c0_i32_0 = arith.constant 0 : i32
    %c0_i32_1 = arith.constant 0 : i32
    return %c0_i32, %c0_i32_0 : i32, i32
  }
  func.func @transform_7(%arg0: i32) -> (i32, i32) {
    %c0_i32 = arith.constant 0 : i32
    %c0_i32_0 = arith.constant 0 : i32
    %c0_i32_1 = arith.constant 0 : i32
    return %c0_i32, %c0_i32_0 : i32, i32
  }
  func.func @transform_8(%arg0: i32) -> (i32, i32) {
    %c0_i32 = arith.constant 0 : i32
    %c0_i32_0 = arith.constant 0 : i32
    %c0_i32_1 = arith.constant 0 : i32
    return %c0_i32, %c0_i32_0 : i32, i32
  }
  func.func @transform_9(%arg0: i32) -> (i32, i32) {
    %c0_i32 = arith.constant 0 : i32
    %c0_i32_0 = arith.constant 0 : i32
    return %c0_i32, %arg0 : i32, i32
  }
}

</mosaic_0001>

<llo_original>
// kernel: tpu_custom_call.1
$region0: #{tpu_custom_call.1}
  #allocation0 [shape = 'u32[]', space=smem, size = 0x4, offset = 0x4, fixed_abs, tag = 'smem constant byte address 0x4 - core index']
  #allocation1 [shape = 'u32[144,128]{1,0:T(1,128)}', space=vmem, size = 0x12000, scoped, tag = 'internal scratch']
  #allocation2 [shape = 'f32[1,1]{1,0:T(1,128)S(1)}', space=vmem, size = 0x200, scoped, tag = 'scoped memory for tpu_custom_call.1']
  %s0 = inlined_call_operand.vmem [shape: f32[128,8], index: 0, kind: input, shape index: {}]
  %s1 = inlined_call_operand.vmem [shape: f32[32,8], index: 1, kind: input, shape index: {}]
  %s2 = inlined_call_operand.vmem [shape: f32[32,1], index: 2, kind: input, shape index: {}]
  %s3 = inlined_call_operand.vmem [shape: f32[16,32], index: 3, kind: input, shape index: {}]
  %s4 = inlined_call_operand.vmem [shape: f32[16,1], index: 4, kind: input, shape index: {}]
  %s5 = inlined_call_operand.vmem [shape: f32[8,16], index: 5, kind: input, shape index: {}]
  %s6 = inlined_call_operand.vmem [shape: f32[8,1], index: 6, kind: input, shape index: {}]
  %s7 = inlined_call_operand.vmem [shape: f32[8,1], index: 7, kind: input, shape index: {}]
  %s8 = inlined_call_operand.<no memory space> [shape: f32[1,1], index: 8, kind: input, shape index: {}]
  %s9 = inlined_call_operand.hbm [shape: f32[1,128], index: 9, kind: output, shape index: {}]
  %s10 = sld [smem:[#allocation0]]
  $region46: #{tpu_custom_call.1} parent=0
    _
  %s12 = ssub.s32 1, %s10
  %s13 = scalar_select 0, %s12, %s10
  %v14 = vstv %s8
  %15 = vst [vmem:[#allocation2] sm:$0x1] %v14
  $region1: #{tpu_custom_call.1} parent=0
    #allocation3 [shape = 'u8[512]{0}', space=vmem, size = 0x400, scoped, tag = 'output window, operand 0, single buffered']
    #allocation4 [shape = 's32[1]{0}', space=sflag, size = 0x4, scoped, tag = 'scoped memory for tpu_custom_call.1']
    %16 = vsyncpa [#allocation4], 0
    // Predicated region
    $region2: #{tpu_custom_call.1} parent=1 // pred_check
      _
    $region3: #{tpu_custom_call.1} parent=1 // pred_check_branch
      %18 = sbr.rel (0) target = $region5
    $region4: #{tpu_custom_call.1} parent=1 // pred_region
      _
    $region5: #{tpu_custom_call.1} parent=1 // pred_fallthru
      _
    // Predicated region
    $region6: #{tpu_custom_call.1} parent=1 // pred_check
      _
    $region7: #{tpu_custom_call.1} parent=1 // pred_check_branch
      %20 = sbr.rel (0) target = $region9
    $region8: #{tpu_custom_call.1} parent=1 // pred_region
      _
    $region9: #{tpu_custom_call.1} parent=1 // pred_fallthru
      _
    // Predicated region
    $region10: #{tpu_custom_call.1} parent=1 // pred_check
      _
    $region11: #{tpu_custom_call.1} parent=1 // pred_check_branch
      %22 = sbr.rel (0) target = $region13
    $region12: #{tpu_custom_call.1} parent=1 // pred_region
      _
    $region13: #{tpu_custom_call.1} parent=1 // pred_fallthru
      _
    // Predicated region
    $region14: #{tpu_custom_call.1} parent=1 // pred_check
      _
    $region15: #{tpu_custom_call.1} parent=1 // pred_check_branch
      %24 = sbr.rel (0) target = $region17
    $region16: #{tpu_custom_call.1} parent=1 // pred_region
      _
    $region17: #{tpu_custom_call.1} parent=1 // pred_fallthru
      _
    // Predicated region
    $region18: #{tpu_custom_call.1} parent=1 // pred_check
      _
    $region19: #{tpu_custom_call.1} parent=1 // pred_check_branch
      %26 = sbr.rel (0) target = $region21
    $region20: #{tpu_custom_call.1} parent=1 // pred_region
      _
    $region21: #{tpu_custom_call.1} parent=1 // pred_fallthru
      _
    // Predicated region
    $region22: #{tpu_custom_call.1} parent=1 // pred_check
      _
    $region23: #{tpu_custom_call.1} parent=1 // pred_check_branch
      %28 = sbr.rel (0) target = $region25
    $region24: #{tpu_custom_call.1} parent=1 // pred_region
      _
    $region25: #{tpu_custom_call.1} parent=1 // pred_fallthru
      _
    // Predicated region
    $region26: #{tpu_custom_call.1} parent=1 // pred_check
      _
    $region27: #{tpu_custom_call.1} parent=1 // pred_check_branch
      %30 = sbr.rel (0) target = $region29
    $region28: #{tpu_custom_call.1} parent=1 // pred_region
      _
    $region29: #{tpu_custom_call.1} parent=1 // pred_fallthru
      _
    // Predicated region
    $region30: #{tpu_custom_call.1} parent=1 // pred_check
      _
    $region31: #{tpu_custom_call.1} parent=1 // pred_check_branch
      %32 = sbr.rel (0) target = $region33
    $region32: #{tpu_custom_call.1} parent=1 // pred_region
      _
    $region33: #{tpu_custom_call.1} parent=1 // pred_fallthru
      _
    // Predicated region
    $region34: #{tpu_custom_call.1} parent=1 // pred_check
      _
    $region35: #{tpu_custom_call.1} parent=1 // pred_check_branch
      %34 = sbr.rel (0) target = $region37
    $region36: #{tpu_custom_call.1} parent=1 // pred_region
      _
    $region37: #{tpu_custom_call.1} parent=1 // pred_fallthru
      _
    %v35 = vld [vmem:[%s0] sm:$0xff]
    %v36 = vld [vmem:[%s0 + $0x8] sm:$0xff]
    %v37 = vld [vmem:[%s0 + $0x10] sm:$0xff]
    %v38 = vld [vmem:[%s0 + $0x18] sm:$0xff]
    %v39 = vld [vmem:[%s0 + $0x20] sm:$0xff]
    %v40 = vld [vmem:[%s0 + $0x28] sm:$0xff]
    %v41 = vld [vmem:[%s0 + $0x30] sm:$0xff]
    %v42 = vld [vmem:[%s0 + $0x38] sm:$0xff]
    %v43 = vld [vmem:[%s0 + $0x40] sm:$0xff]
    %v44 = vld [vmem:[%s0 + $0x48] sm:$0xff]
    %v45 = vld [vmem:[%s0 + $0x50] sm:$0xff]
    %v46 = vld [vmem:[%s0 + $0x58] sm:$0xff]
    %v47 = vld [vmem:[%s0 + $0x60] sm:$0xff]
    %v48 = vld [vmem:[%s0 + $0x68] sm:$0xff]
    %v49 = vld [vmem:[%s0 + $0x70] sm:$0xff]
    %v50 = vld [vmem:[%s0 + $0x78] sm:$0xff]
    %v51 = vld [vmem:[%s1] sm:$0xff]
    %v52 = vld [vmem:[%s1 + $0x8] sm:$0xff]
    %v53 = vld [vmem:[%s1 + $0x10] sm:$0xff]
    %v54 = vld [vmem:[%s1 + $0x18] sm:$0xff]
    %v55 = vld [vmem:[%s2] sm:$0xff]
    %v56 = vld [vmem:[%s2 + $0x8] sm:$0xff]
    %v57 = vld [vmem:[%s2 + $0x10] sm:$0xff]
    %v58 = vld [vmem:[%s2 + $0x18] sm:$0xff]
    %60 = vset.pattern.permute.xlu0 0
    %61 = vperm.xlu0 %60, %v55
    %v62 = vpop.permute.xlu0 %61
    %65 = vset.pattern.permute.xlu0 0
    %66 = vperm.xlu0 %65, %v56
    %v67 = vpop.permute.xlu0 %66
    %70 = vset.pattern.permute.xlu0 0
    %71 = vperm.xlu0 %70, %v57
    %v72 = vpop.permute.xlu0 %71
    %75 = vset.pattern.permute.xlu0 0
    %76 = vperm.xlu0 %75, %v58
    %v77 = vpop.permute.xlu0 %76
    %vm79 = vcmask 64512
    %v81 = vsel %vm79, %v51, 0
    %v84 = vsel %vm79, %v52, 0
    %v87 = vsel %vm79, %v53, 0
    %v90 = vsel %vm79, %v54, 0
    %v93 = vsel %vm79, %v35, 0
    %v96 = vsel %vm79, %v36, 0
    %v99 = vsel %vm79, %v37, 0
    %v102 = vsel %vm79, %v38, 0
    %v105 = vsel %vm79, %v39, 0
    %v108 = vsel %vm79, %v40, 0
    %v111 = vsel %vm79, %v41, 0
    %v114 = vsel %vm79, %v42, 0
    %v117 = vsel %vm79, %v43, 0
    %v120 = vsel %vm79, %v44, 0
    %v123 = vsel %vm79, %v45, 0
    %v126 = vsel %vm79, %v46, 0
    %v129 = vsel %vm79, %v47, 0
    %v132 = vsel %vm79, %v48, 0
    %v135 = vsel %vm79, %v49, 0
    %v138 = vsel %vm79, %v50, 0
    %140 = vmatprep.subr.mxu0 0.0
    %141 = vmatpush1.xpose.msra.mxu0 %v138
    %142 = vmatprep.subr.mxu0 0.0
    %143 = vmatpush1.xpose.msra.mxu0 %v135
    %144 = vmatprep.subr.mxu0 0.0
    %145 = vmatpush1.xpose.msra.mxu0 %v132
    %146 = vmatprep.subr.mxu0 0.0
    %147 = vmatpush1.xpose.msra.mxu0 %v129
    %148 = vmatprep.subr.mxu0 0.0
    %149 = vmatpush1.xpose.msra.mxu0 %v126
    %150 = vmatprep.subr.mxu0 0.0
    %151 = vmatpush1.xpose.msra.mxu0 %v123
    %152 = vmatprep.subr.mxu0 0.0
    %153 = vmatpush1.xpose.msra.mxu0 %v120
    %154 = vmatprep.subr.mxu0 0.0
    %155 = vmatpush1.xpose.msra.mxu0 %v117
    %156 = vmatprep.subr.mxu0 0.0
    %157 = vmatpush1.xpose.msra.mxu0 %v114
    %158 = vmatprep.subr.mxu0 0.0
    %159 = vmatpush1.xpose.msra.mxu0 %v111
    %160 = vmatprep.subr.mxu0 0.0
    %161 = vmatpush1.xpose.msra.mxu0 %v108
    %162 = vmatprep.subr.mxu0 0.0
    %163 = vmatpush1.xpose.msra.mxu0 %v105
    %164 = vmatprep.subr.mxu0 0.0
    %165 = vmatpush1.xpose.msra.mxu0 %v102
    %166 = vmatprep.subr.mxu0 0.0
    %167 = vmatpush1.xpose.msra.mxu0 %v99
    %168 = vmatprep.subr.mxu0 0.0
    %169 = vmatpush1.xpose.msra.mxu0 %v96
    %170 = vmatprep.subr.mxu0 0.0
    %171 = vmatpush1.xpose.msra.mxu0 %v93
    %172 = vmatprep.subr.mxu0 0.0
    %173 = vmatpush2.xpose.msra.mxu0 0.0
    %174 = vmatprep.subr.mxu0 0.0
    %175 = vmatpush2.xpose.msra.mxu0 0.0
    %176 = vmatprep.subr.mxu0 0.0
    %177 = vmatpush2.xpose.msra.mxu0 0.0
    %178 = vmatprep.subr.mxu0 0.0
    %179 = vmatpush2.xpose.msra.mxu0 0.0
    %180 = vmatprep.subr.mxu0 0.0
    %181 = vmatpush2.xpose.msra.mxu0 0.0
    %182 = vmatprep.subr.mxu0 0.0
    %183 = vmatpush2.xpose.msra.mxu0 0.0
    %184 = vmatprep.subr.mxu0 0.0
    %185 = vmatpush2.xpose.msra.mxu0 0.0
    %186 = vmatprep.subr.mxu0 0.0
    %187 = vmatpush2.xpose.msra.mxu0 0.0
    %188 = vmatprep.subr.mxu0 0.0
    %189 = vmatpush2.xpose.msra.mxu0 0.0
    %190 = vmatprep.subr.mxu0 0.0
    %191 = vmatpush2.xpose.msra.mxu0 0.0
    %192 = vmatprep.subr.mxu0 0.0
    %193 = vmatpush2.xpose.msra.mxu0 0.0
    %194 = vmatprep.subr.mxu0 0.0
    %195 = vmatpush2.xpose.msra.mxu0 0.0
    %196 = vmatprep.subr.mxu0 0.0
    %197 = vmatpush2.xpose.msra.mxu0 0.0
    %198 = vmatprep.subr.mxu0 0.0
    %199 = vmatpush2.xpose.msra.mxu0 0.0
    %200 = vmatprep.subr.mxu0 0.0
    %201 = vmatpush2.xpose.msra.mxu0 0.0
    %202 = vmatprep.subr.mxu0 0.0
    %203 = vmatpush2.xpose.msra.mxu0 0.0
    %204 = vmatprep.mubr.f32.mxu0 0.0
    %205 = vmatmul.mubr.f32.gmra.mxu0 %v81
    %v206 = vpop.f32.mrf.mxu0
    %v207 = vadd.f32 %v62, %v206
    %v208 = vpop.f32.mrf.mxu0
    %209 = vmatprep.mubr.f32.mxu0 0.0
    %210 = vmatmul.mubr.f32.gmra.mxu0 %v84
    %v211 = vpop.f32.mrf.mxu0
    %v212 = vadd.f32 %v67, %v211
    %v213 = vpop.f32.mrf.mxu0
    %214 = vmatprep.mubr.f32.mxu0 0.0
    %215 = vmatmul.mubr.f32.gmra.mxu0 %v87
    %v216 = vpop.f32.mrf.mxu0
    %v217 = vadd.f32 %v72, %v216
    %v218 = vpop.f32.mrf.mxu0
    %219 = vmatprep.mubr.f32.mxu0 0.0
    %220 = vmatmul.mubr.f32.gmra.mxu0 %v90
    %v221 = vpop.f32.mrf.mxu0
    %v222 = vadd.f32 %v77, %v221
    %v223 = vpop.f32.mrf.mxu0
    %224 = vdwg.mxu0
    %v225 = vmax.f32 %v207, 0.0
    %v226 = vmax.f32 %v212, 0.0
    %v227 = vmax.f32 %v217, 0.0
    %v228 = vmax.f32 %v222, 0.0
    %v229 = vld [vmem:[%s3] sm:$0xff]
    %v230 = vld [vmem:[%s3 + $0x8] sm:$0xff]
    %v231 = vld [vmem:[%s4] sm:$0xff]
    %v232 = vld [vmem:[%s4 + $0x8] sm:$0xff]
    %234 = vset.pattern.permute.xlu0 0
    %235 = vperm.xlu0 %234, %v231
    %v236 = vpop.permute.xlu0 %235
    %239 = vset.pattern.permute.xlu0 0
    %240 = vperm.xlu0 %239, %v232
    %v241 = vpop.permute.xlu0 %240
    %vm243 = vcmask 261120
    %v245 = vsel %vm243, %v229, 0
    %v248 = vsel %vm243, %v230, 0
    %250 = vmatprep.subr.mxu0 0.0
    %251 = vmatpush1.msra.mxu0 0.0
    %252 = vmatprep.subr.mxu0 0.0
    %253 = vmatpush1.msra.mxu0 0.0
    %254 = vmatprep.subr.mxu0 0.0
    %255 = vmatpush1.msra.mxu0 0.0
    %256 = vmatprep.subr.mxu0 0.0
    %257 = vmatpush1.msra.mxu0 0.0
    %258 = vmatprep.subr.mxu0 0.0
    %259 = vmatpush1.msra.mxu0 0.0
    %260 = vmatprep.subr.mxu0 0.0
    %261 = vmatpush1.msra.mxu0 0.0
    %262 = vmatprep.subr.mxu0 0.0
    %263 = vmatpush1.msra.mxu0 0.0
    %264 = vmatprep.subr.mxu0 0.0
    %265 = vmatpush1.msra.mxu0 0.0
    %266 = vmatprep.subr.mxu0 0.0
    %267 = vmatpush1.msra.mxu0 0.0
    %268 = vmatprep.subr.mxu0 0.0
    %269 = vmatpush1.msra.mxu0 0.0
    %270 = vmatprep.subr.mxu0 0.0
    %271 = vmatpush1.msra.mxu0 0.0
    %272 = vmatprep.subr.mxu0 0.0
    %273 = vmatpush1.msra.mxu0 0.0
    %274 = vmatprep.subr.mxu0 0.0
    %275 = vmatpush1.msra.mxu0 %v228
    %276 = vmatprep.subr.mxu0 0.0
    %277 = vmatpush1.msra.mxu0 %v227
    %278 = vmatprep.subr.mxu0 0.0
    %279 = vmatpush1.msra.mxu0 %v226
    %280 = vmatprep.subr.mxu0 0.0
    %281 = vmatpush1.msra.mxu0 %v225
    %282 = vmatprep.subr.mxu0 0.0
    %283 = vmatpush2.msra.mxu0 0.0
    %284 = vmatprep.subr.mxu0 0.0
    %285 = vmatpush2.msra.mxu0 0.0
    %286 = vmatprep.subr.mxu0 0.0
    %287 = vmatpush2.msra.mxu0 0.0
    %288 = vmatprep.subr.mxu0 0.0
    %289 = vmatpush2.msra.mxu0 0.0
    %290 = vmatprep.subr.mxu0 0.0
    %291 = vmatpush2.msra.mxu0 0.0
    %292 = vmatprep.subr.mxu0 0.0
    %293 = vmatpush2.msra.mxu0 0.0
    %294 = vmatprep.subr.mxu0 0.0
    %295 = vmatpush2.msra.mxu0 0.0
    %296 = vmatprep.subr.mxu0 0.0
    %297 = vmatpush2.msra.mxu0 0.0
    %298 = vmatprep.subr.mxu0 0.0
    %299 = vmatpush2.msra.mxu0 0.0
    %300 = vmatprep.subr.mxu0 0.0
    %301 = vmatpush2.msra.mxu0 0.0
    %302 = vmatprep.subr.mxu0 0.0
    %303 = vmatpush2.msra.mxu0 0.0
    %304 = vmatprep.subr.mxu0 0.0
    %305 = vmatpush2.msra.mxu0 0.0
    %306 = vmatprep.subr.mxu0 0.0
    %307 = vmatpush2.msra.mxu0 0.0
    %308 = vmatprep.subr.mxu0 0.0
    %309 = vmatpush2.msra.mxu0 0.0
    %310 = vmatprep.subr.mxu0 0.0
    %311 = vmatpush2.msra.mxu0 0.0
    %312 = vmatprep.subr.mxu0 0.0
    %313 = vmatpush2.msra.mxu0 0.0
    %314 = vmatprep.mubr.f32.mxu0 0.0
    %315 = vmatmul.mubr.f32.gmra.mxu0 %v245
    %v316 = vpop.f32.mrf.mxu0
    %v317 = vadd.f32 %v236, %v316
    %v318 = vpop.f32.mrf.mxu0
    %319 = vmatprep.mubr.f32.mxu0 0.0
    %320 = vmatmul.mubr.f32.gmra.mxu0 %v248
    %v321 = vpop.f32.mrf.mxu0
    %v322 = vadd.f32 %v241, %v321
    %v323 = vpop.f32.mrf.mxu0
    %324 = vdwg.mxu0
    %v325 = vmax.f32 %v317, 0.0
    %v326 = vmax.f32 %v322, 0.0
    %v327 = vld [vmem:[%s5] sm:$0xff]
    %v328 = vld [vmem:[%s6] sm:$0xff]
    %330 = vset.pattern.permute.xlu0 0
    %331 = vperm.xlu0 %330, %v328
    %v332 = vpop.permute.xlu0 %331
    %vm334 = vcmask 130048
    %v336 = vsel %vm334, %v327, 0
    %338 = vmatprep.subr.mxu0 0.0
    %339 = vmatpush1.msra.mxu0 0.0
    %340 = vmatprep.subr.mxu0 0.0
    %341 = vmatpush1.msra.mxu0 0.0
    %342 = vmatprep.subr.mxu0 0.0
    %343 = vmatpush1.msra.mxu0 0.0
    %344 = vmatprep.subr.mxu0 0.0
    %345 = vmatpush1.msra.mxu0 0.0
    %346 = vmatprep.subr.mxu0 0.0
    %347 = vmatpush1.msra.mxu0 0.0
    %348 = vmatprep.subr.mxu0 0.0
    %349 = vmatpush1.msra.mxu0 0.0
    %350 = vmatprep.subr.mxu0 0.0
    %351 = vmatpush1.msra.mxu0 0.0
    %352 = vmatprep.subr.mxu0 0.0
    %353 = vmatpush1.msra.mxu0 0.0
    %354 = vmatprep.subr.mxu0 0.0
    %355 = vmatpush1.msra.mxu0 0.0
    %356 = vmatprep.subr.mxu0 0.0
    %357 = vmatpush1.msra.mxu0 0.0
    %358 = vmatprep.subr.mxu0 0.0
    %359 = vmatpush1.msra.mxu0 0.0
    %360 = vmatprep.subr.mxu0 0.0
    %361 = vmatpush1.msra.mxu0 0.0
    %362 = vmatprep.subr.mxu0 0.0
    %363 = vmatpush1.msra.mxu0 0.0
    %364 = vmatprep.subr.mxu0 0.0
    %365 = vmatpush1.msra.mxu0 0.0
    %366 = vmatprep.subr.mxu0 0.0
    %367 = vmatpush1.msra.mxu0 %v326
    %368 = vmatprep.subr.mxu0 0.0
    %369 = vmatpush1.msra.mxu0 %v325
    %370 = vmatprep.subr.mxu0 0.0
    %371 = vmatpush2.msra.mxu0 0.0
    %372 = vmatprep.subr.mxu0 0.0
    %373 = vmatpush2.msra.mxu0 0.0
    %374 = vmatprep.subr.mxu0 0.0
    %375 = vmatpush2.msra.mxu0 0.0
    %376 = vmatprep.subr.mxu0 0.0
    %377 = vmatpush2.msra.mxu0 0.0
    %378 = vmatprep.subr.mxu0 0.0
    %379 = vmatpush2.msra.mxu0 0.0
    %380 = vmatprep.subr.mxu0 0.0
    %381 = vmatpush2.msra.mxu0 0.0
    %382 = vmatprep.subr.mxu0 0.0
    %383 = vmatpush2.msra.mxu0 0.0
    %384 = vmatprep.subr.mxu0 0.0
    %385 = vmatpush2.msra.mxu0 0.0
    %386 = vmatprep.subr.mxu0 0.0
    %387 = vmatpush2.msra.mxu0 0.0
    %388 = vmatprep.subr.mxu0 0.0
    %389 = vmatpush2.msra.mxu0 0.0
    %390 = vmatprep.subr.mxu0 0.0
    %391 = vmatpush2.msra.mxu0 0.0
    %392 = vmatprep.subr.mxu0 0.0
    %393 = vmatpush2.msra.mxu0 0.0
    %394 = vmatprep.subr.mxu0 0.0
    %395 = vmatpush2.msra.mxu0 0.0
    %396 = vmatprep.subr.mxu0 0.0
    %397 = vmatpush2.msra.mxu0 0.0
    %398 = vmatprep.subr.mxu0 0.0
    %399 = vmatpush2.msra.mxu0 0.0
    %400 = vmatprep.subr.mxu0 0.0
    %401 = vmatpush2.msra.mxu0 0.0
    %402 = vmatprep.mubr.f32.mxu0 0.0
    %403 = vmatmul.mubr.f32.gmra.mxu0 %v336
    %v404 = vpop.f32.mrf.mxu0
    %v405 = vadd.f32 %v332, %v404
    %v406 = vpop.f32.mrf.mxu0
    %407 = vdwg.mxu0
    %v408 = vmax.f32 %v405, 0.0
    %v409 = vld [vmem:[%s7] sm:$0xff]
    %411 = vset.pattern.permute.xlu0 0
    %412 = vperm.xlu0 %411, %v409
    %v413 = vpop.permute.xlu0 %412
    %v415 = vmul.f32 %v413, %v408
    %v416 = vrot.slane %v415, 4
    %v417 = vadd.f32 %v415, %v416
    %v418 = vrot.slane %v417, 2
    %v419 = vadd.f32 %v417, %v418
    %v420 = vrot.slane %v419, 1
    %v421 = vadd.f32 %v419, %v420
    %v422 = vld [vmem:[#allocation2] sm:$0x1]
    %424 = vset.pattern.permute.xlu0 0
    %425 = vperm.xlu0 %424, %v422
    %v426 = vpop.permute.xlu0 %425
    %v428 = vlaneseq
    %v429 = vshrl.u32 %v428, 7
    %v430 = vsub.s32 0, %v429
    %v431 = vrot.slane %v426, %v430
    %v432 = vadd.f32 %v421, %v431
    %v433 = vsub.f32 0.0, %v432
    %v434 = vmul.f32 %v433, 1.442695
    %v435 = vpow.pop %v434
    %v436 = vadd.f32 %v435, 1.0
    %v437 = vrcp.pop %v436
    %v438 = vmul.f32 1.0, %v437
    %439 = vst [vmem:[#allocation3] sm:$0x1] %v438
    // Predicated region
    $region38: #{tpu_custom_call.1} parent=1 // pred_check
      _
    $region39: #{tpu_custom_call.1} parent=1 // pred_check_branch
      %441 = sbr.rel (0) target = $region41
    $region40: #{tpu_custom_call.1} parent=1 // pred_region
      %s443 = ssub.s32 16, 16
      %444 = vsyncadd [#allocation4], %s443
      %s446 = sshll.u32 [#allocation3], 4
      %s447 = int_to_ptr.vmem [resolvable:$true] %s446
      %449 = dma.vmem_to_hbm [thread:$0]  %s447, 16, %s9, [#allocation4]
    $region41: #{tpu_custom_call.1} parent=1 // pred_fallthru
      _
    // Predicated region
    $region42: #{tpu_custom_call.1} parent=1 // pred_check
      _
    $region43: #{tpu_custom_call.1} parent=1 // pred_check_branch
      %451 = sbr.rel (0) target = $region45
    $region44: #{tpu_custom_call.1} parent=1 // pred_region
      %452 = dma.done [#allocation4], 16
    $region45: #{tpu_custom_call.1} parent=1 // pred_fallthru
      _
    %453 = vsyncpa [#allocation4], 1

</llo_original>
